<compile_context>
chip_gen: v7x
topology: tpu7x:2x2x1
jax: 0.10.0
libtpu: 0.0.40
codegen_flags: <defaults>
</compile_context>

<pallas_src>
import math

import jax
import jax.numpy as jnp
from jax.experimental import pallas as pl
from jax.experimental.pallas import tpu as pltpu


# Per-buffer VMEM tile target.  With default double-buffering there are ~6
# resident tiles (x-in, out, pe) -> ~24 MiB, safe on v7x's 64 MiB VMEM and
# well under the explicit 48 MiB scoped limit set below.
_TILE_BYTES = 4 * 1024 * 1024
# Aim for at least this many total grid steps so input DMA / VPU add / output
# DMA overlap across iterations (per-step overhead is only ~0.35 us) and both
# v7x TensorCores receive work.
_TARGET_STEPS = 8


def _round_up(x, m):
    return ((x + m - 1) // m) * m


def _pe_add_kernel(x_ref, pe_ref, o_ref):
    # x_ref / pe_ref / o_ref share the same 2-D tile shape; the batch dim is
    # squeezed away by the BlockSpec so no in-kernel broadcast is needed.
    o_ref[...] = x_ref[...] + pe_ref[...]


def make_positional_encoding_table(d_model, max_len=5000, dtype=jnp.float32):
    """Deterministic sinusoidal PE table, identical to the PyTorch __init__."""
    position = jnp.arange(0.0, max_len, dtype=jnp.float32)[:, None]          # (L, 1)
    div_term = jnp.exp(
        jnp.arange(0.0, d_model, 2.0, dtype=jnp.float32)
        * -(math.log(10000.0) / d_model)
    )                                                                         # (ceil(D/2),)
    args = position * div_term                                                # (L, ceil(D/2))
    pe = jnp.zeros((max_len, d_model), dtype=jnp.float32)
    pe = pe.at[:, 0::2].set(jnp.sin(args))
    # Truncate for odd d_model (the PyTorch original would raise there).
    pe = pe.at[:, 1::2].set(jnp.cos(args[:, : d_model // 2]))
    return pe.astype(dtype)


def positional_encoding_forward(x, pe_table, dropout_p=0.1, training=False):
    """x: (B, S, D). Returns x + pe[:S] (dropout is identity in eval mode)."""
    # TODO(synk): training-mode dropout is not implemented; eval forward only.
    del dropout_p, training

    B, S, D = x.shape
    itemsize = jnp.dtype(x.dtype).itemsize
    if pe_table.dtype != x.dtype:
        # Keep HBM traffic and the in-kernel add in x.dtype.
        pe_table = pe_table.astype(x.dtype)

    # Packed-tile sublane multiple: 8 (f32), 16 (bf16), 32 (int8/fp8).
    sublane_min = max(8, 8 * (4 // itemsize))
    # Desired S-tile (or N-tile) count so n_* x B >= _TARGET_STEPS.
    n_tiles_target = max(1, -(-_TARGET_STEPS // B))

    cost = pl.CostEstimate(
        flops=B * S * D,
        transcendentals=0,
        bytes_accessed=(2 * B * S * D + S * D) * itemsize,
    )
    cparams = pltpu.CompilerParams(
        dimension_semantics=("parallel", "parallel"),
        vmem_limit_bytes=48 * 1024 * 1024,
    )

    if D % 128 == 0:
        # ---- Lane-dense path: tile the sequence dim, keep D on the lanes. ----
        rows_budget = max(
            sublane_min,
            (_TILE_BYTES // (D * itemsize)) // sublane_min * sublane_min,
        )
        ts = _round_up(-(-S // n_tiles_target), sublane_min)   # split S for steps
        ts = min(ts, rows_budget)                              # cap VMEM per tile
        ts = min(ts, _round_up(S, sublane_min))                # don't exceed S (rounded)
        n_s = pl.cdiv(S, ts)
        # Last block may overhang S: x load is padded, output store is masked,
        # and the PE block reads valid rows from the full max_len table.

        return pl.pallas_call(
            _pe_add_kernel,
            out_shape=jax.ShapeDtypeStruct((B, S, D), x.dtype),
            grid_spec=pltpu.PrefetchScalarGridSpec(
                num_scalar_prefetch=0,
                grid=(n_s, B),          # B innermost: PE tile DMA'd once per S-tile
                in_specs=[
                    pl.BlockSpec((pl.Squeezed(), ts, D), lambda s, b: (b, s, 0)),
                    pl.BlockSpec((ts, D), lambda s, b: (s, 0)),
                ],
                out_specs=pl.BlockSpec((pl.Squeezed(), ts, D), lambda s, b: (b, s, 0)),
            ),
            input_output_aliases={0: 0},   # x buffer reused for the output
            compiler_params=cparams,
            cost_estimate=cost,
        )(x, pe_table)

    # ---- Fallback for D not a multiple of 128: flatten (S, D) so the output
    # last dim is lane-dense (avoids masked vst.msk partial stores except on a
    # single ragged tail block). ----
    N = S * D
    x_flat = x.reshape(B, 1, N)
    pe_flat = pe_table[:S].reshape(1, N)   # wrapper slice unavoidable on this path

    lanes_budget = max(128, (_TILE_BYTES // itemsize) // 128 * 128)
    tn = _round_up(-(-N // n_tiles_target), 128)   # split N for grid steps
    tn = min(tn, lanes_budget)                     # cap VMEM per tile
    tn = min(tn, _round_up(N, 128))                # don't exceed N (rounded)
    n_n = pl.cdiv(N, tn)

    out_flat = pl.pallas_call(
        _pe_add_kernel,
        out_shape=jax.ShapeDtypeStruct((B, 1, N), x.dtype),
        grid_spec=pltpu.PrefetchScalarGridSpec(
            num_scalar_prefetch=0,
            grid=(n_n, B),                 # B innermost: PE tile reused across batch
            in_specs=[
                pl.BlockSpec((pl.Squeezed(), 1, tn), lambda n, b: (b, 0, n)),
                pl.BlockSpec((1, tn), lambda n, b: (0, n)),
            ],
            out_specs=pl.BlockSpec((pl.Squeezed(), 1, tn), lambda n, b: (b, 0, n)),
        ),
        input_output_aliases={0: 0},
        compiler_params=cparams,
        cost_estimate=cost,
    )(x_flat, pe_flat)
    return out_flat.reshape(B, S, D)


if __name__ == "__main__":
    # Case 1: small D (< 128), f32 -- exercises the lane-dense flattened path.
    B, S, D = 2, 8, 32
    key = jax.random.PRNGKey(0)
    x = jax.random.normal(key, (B, S, D), dtype=jnp.float32)
    pe_table = make_positional_encoding_table(d_model=D, max_len=5000, dtype=x.dtype)
    ref = x + pe_table[None, :S, :]

    out = jax.block_until_ready(
        positional_encoding_forward(x, pe_table, dropout_p=0.1, training=False)
    )
    assert out.shape == (B, S, D)
    assert jnp.allclose(out, ref, atol=1e-6), "mismatch vs reference (flat path)"

    # Case 2: lane-aligned D (= 128), f32 -- exercises the S-tiled path with an
    # evenly dividing S tile.
    B2, S2, D2 = 2, 16, 128
    x2 = jax.random.normal(jax.random.PRNGKey(0), (B2, S2, D2), dtype=jnp.float32)
    pe2 = make_positional_encoding_table(d_model=D2, max_len=5000, dtype=x2.dtype)
    ref2 = x2 + pe2[None, :S2, :]

    out2 = jax.block_until_ready(
        positional_encoding_forward(x2, pe2, dropout_p=0.1, training=False)
    )
    assert out2.shape == (B2, S2, D2)
    assert jnp.allclose(out2, ref2, atol=1e-6), "mismatch vs reference (tiled path)"

    # Case 3: bf16, B=1, S not a multiple of the bf16 sublane tile (16) --
    # exercises dtype-aware sublane rounding + masked ragged last block +
    # S-splitting for a single-batch input.
    B3, S3, D3 = 1, 40, 256
    x3 = jax.random.normal(jax.random.PRNGKey(0), (B3, S3, D3), dtype=jnp.bfloat16)
    pe3 = make_positional_encoding_table(d_model=D3, max_len=5000, dtype=x3.dtype)
    ref3 = x3 + pe3[None, :S3, :]

    out3 = jax.block_until_ready(
        positional_encoding_forward(x3, pe3, dropout_p=0.1, training=False)
    )
    assert out3.shape == (B3, S3, D3)
    assert jnp.allclose(out3.astype(jnp.float32), ref3.astype(jnp.float32),
                        atol=1e-2), "mismatch vs reference (bf16 ragged path)"

    print("KERNEL_OK")
</pallas_src>

<mosaic_0001>
module attributes {stable_mosaic.version = 11 : i64} {
  func.func @_pe_add_kernel(%arg0: i32, %arg1: i32, %arg2: memref<1x1x128xf32, #tpu.memory_space<vmem>>, %arg3: memref<1x128xf32, #tpu.memory_space<vmem>>, %arg4: memref<1x1x128xf32, #tpu.memory_space<vmem>>) attributes {dimension_semantics = [#tpu.dimension_semantics<parallel>, #tpu.dimension_semantics<parallel>], iteration_bounds = array<i64: 2, 2>, scalar_prefetch = 0 : i64, scratch_operands = 0 : i64, tpu.core_type = #tpu.core_type<tc>, window_params = [{transform_indices = @transform_0, window_bounds = array<i64: 1, 1, 128>}, {transform_indices = @transform_1, window_bounds = array<i64: 1, 128>}, {transform_indices = @transform_2, window_bounds = array<i64: 1, 1, 128>}]} {
    %c0 = arith.constant 0 : index
    %c0_0 = arith.constant 0 : index
    %c0_1 = arith.constant 0 : index
    %0 = vector.load %arg2[%c0, %c0_0, %c0_1] : memref<1x1x128xf32, #tpu.memory_space<vmem>>, vector<1x1x128xf32>
    %1 = vector.shape_cast %0 : vector<1x1x128xf32> to vector<1x128xf32>
    %c0_2 = arith.constant 0 : index
    %c0_3 = arith.constant 0 : index
    %2 = vector.load %arg3[%c0_2, %c0_3] : memref<1x128xf32, #tpu.memory_space<vmem>>, vector<1x128xf32>
    %3 = arith.addf %1, %2 : vector<1x128xf32>
    %c0_4 = arith.constant 0 : index
    %c0_5 = arith.constant 0 : index
    %c0_6 = arith.constant 0 : index
    %4 = vector.load %arg4[%c0_4, %c0_5, %c0_6] : memref<1x1x128xf32, #tpu.memory_space<vmem>>, vector<1x1x128xf32>
    %5 = vector.shape_cast %4 : vector<1x1x128xf32> to vector<1x128xf32>
    %6 = vector.shape_cast %3 : vector<1x128xf32> to vector<1x1x128xf32>
    tpu.vector_store %arg4[%c0_4, %c0_5, %c0_6], %6 {strides = array<i32>} : memref<1x1x128xf32, #tpu.memory_space<vmem>>, vector<1x1x128xf32>,
    return
  }
  func.func @transform_0(%arg0: i32, %arg1: i32) -> (i32, i32, i32) {
    %c0_i32 = arith.constant 0 : i32
    %c0_i32_0 = arith.constant 0 : i32
    return %arg1, %c0_i32, %arg0 : i32, i32, i32
  }
  func.func @transform_1(%arg0: i32, %arg1: i32) -> (i32, i32) {
    %c0_i32 = arith.constant 0 : i32
    %c0_i32_0 = arith.constant 0 : i32
    return %c0_i32, %arg0 : i32, i32
  }
  func.func @transform_2(%arg0: i32, %arg1: i32) -> (i32, i32, i32) {
    %c0_i32 = arith.constant 0 : i32
    %c0_i32_0 = arith.constant 0 : i32
    return %arg1, %c0_i32, %arg0 : i32, i32, i32
  }
}

</mosaic_0001>

<llo_original>
// kernel: tpu_custom_call.1
$region0: #{tpu_custom_call.1}
  #allocation0 [shape = 'u32[]', space=smem, size = 0x4, offset = 0x4, fixed_abs, tag = 'smem constant byte address 0x4 - core index']
  #allocation1 [shape = 'u32[144,128]{1,0:T(1,128)}', space=vmem, size = 0x12000, scoped, tag = 'internal scratch']
  %s0 = inlined_call_operand.hbm [shape: f32[2,1,256], index: 0, kind: input, shape index: {}, may-alias: {0,2}]
  %s1 = inlined_call_operand.vmem [shape: f32[1,256], index: 1, kind: input, shape index: {}]
  %s2 = inlined_call_operand.hbm [shape: f32[2,1,256], index: 2, kind: output, shape index: {}, may-alias: {0,2}]
  %s3 = sld [smem:[#allocation0]]
  $region45: #{tpu_custom_call.1} parent=0
    _
  %s5 = ssub.s32 1, %s3
  %s6 = scalar_select 0, %s5, %s3
  $region1: #{tpu_custom_call.1} parent=0
    #allocation2 [shape = 'u8[1024]{0}', space=vmem, size = 0x400, scoped, tag = 'input window, operand 0']
    #allocation3 [shape = 's32[2]{0}', space=sflag, size = 0x8, scoped, tag = 'scoped memory for tpu_custom_call.1']
    #allocation4 [shape = 's32[2]{0}', space=sflag, size = 0x8, scoped, tag = 'scoped memory for tpu_custom_call.1']
    #allocation5 [shape = 'u8[1024]{0}', space=vmem, size = 0x400, scoped, tag = 'output window, operand 0']
    %7 = vsyncpa [#allocation3], 0
    %s8 = scalar_lea.sflag [#allocation3], 1
    %9 = vsyncpa %s8, 0
    %10 = vsyncpa [#allocation4], 0
    %s11 = scalar_lea.sflag [#allocation4], 1
    %12 = vsyncpa %s11, 0
    loop: start=0, step=1, limit=6
    $region2: #{tpu_custom_call.1} parent=1 // loop_pre_header
      _
    $region3: #{tpu_custom_call.1} parent=1 // loop_header
      %s14 = sphi 0, %s18
      %p15 = scmp.ge.s32.totalorder %s14, 6
      %s21 = sphi 0, %s33
      %s22 = sphi 0, %s29
      %s23 = sphi 0, %s21
      %s24 = sphi 0, %s22
      %s25 = sphi 0, %s23
      %s26 = sphi 0, %s24
      %s38 = sphi 0, %s40
      %s41 = sphi 0, %s38
      %s42 = sphi 0, %s41
      %s58 = sphi 0, %s42
      %s64 = sphi 0, %s66
      %s67 = sphi 0, %s64
      %s68 = sphi 0, %s67
      %s84 = sphi 0, %s68
      %s92 = sphi 0, %s94
      %s95 = sphi 0, %s92
      %s96 = sphi 0, %s95
      %s112 = sphi 0, %s96
    $region4: #{tpu_custom_call.1} parent=1 // loop_header_branch
      %17 = sbr.rel (%p15) target = $region8
    $region5: #{tpu_custom_call.1} parent=1 // loop_body
      %s19 = ssub.s32 %s14, 1
      %s20 = ssub.s32 %s14, 2
      %s27 = sadd.s32 1, %s22
      %p28 = scmp.ge.s32.totalorder %s27, 2
      %s29 = scalar_select %p28, 0, %s27
      %s30 = sadd.s32 1, %s21
      %s31 = scalar_select %p28, %s30, %s21
      %p32 = scmp.ge.s32.totalorder %s31, 2
      %s33 = scalar_select %p32, 0, %s31
      %s34 = ssub.s32 %s22, %s29
      %s35 = ssub.s32 %s21, %s33
      %s36 = sor.u32 %s34, %s35
      %p37 = scmp.eq.s32.totalorder %s36, 0
      %s39 = sadd.s32 %s38, 1
      %s40 = scalar_select %p37, %s38, %s39
      %p43 = pneg %p37
      %p44 = scmp.eq.s32.totalorder %s14, 3
      %p45 = por %p43, %p44
      %p46 = scmp.ne.s32.totalorder %s38, %s41
      %p47 = scmp.eq.s32.totalorder %s14, 0
      %p48 = por %p46, %p47
      %p49 = scmp.ne.s32.totalorder %s38, %s41
      %p50 = scmp.eq.s32.totalorder %s19, 3
      %p51 = por %p49, %p50
      %p52 = scmp.ne.s32.totalorder %s41, %s42
      %p53 = scmp.eq.s32.totalorder %s19, 0
      %p54 = por %p52, %p53
      %p55 = scmp.ne.s32.totalorder %s41, %s42
      %p56 = scmp.eq.s32.totalorder %s20, 3
      %p57 = por %p55, %p56
      %p59 = scmp.ne.s32.totalorder %s42, %s58
      %p60 = scmp.eq.s32.totalorder %s20, 0
      %p61 = por %p59, %p60
      %s62 = ssub.s32 %s21, %s33
      %p63 = scmp.eq.s32.totalorder %s62, 0
      %s65 = sadd.s32 %s64, 1
      %s66 = scalar_select %p63, %s64, %s65
      %p69 = pneg %p63
      %p70 = scmp.eq.s32.totalorder %s14, 3
      %p71 = por %p69, %p70
      %p72 = scmp.ne.s32.totalorder %s64, %s67
      %p73 = scmp.eq.s32.totalorder %s14, 0
      %p74 = por %p72, %p73
      %p75 = scmp.ne.s32.totalorder %s64, %s67
      %p76 = scmp.eq.s32.totalorder %s19, 3
      %p77 = por %p75, %p76
      %p78 = scmp.ne.s32.totalorder %s67, %s68
      %p79 = scmp.eq.s32.totalorder %s19, 0
      %p80 = por %p78, %p79
      %p81 = scmp.ne.s32.totalorder %s67, %s68
      %p82 = scmp.eq.s32.totalorder %s20, 3
      %p83 = por %p81, %p82
      %p85 = scmp.ne.s32.totalorder %s68, %s84
      %p86 = scmp.eq.s32.totalorder %s20, 0
      %p87 = por %p85, %p86
      %s88 = ssub.s32 %s22, %s29
      %s89 = ssub.s32 %s21, %s33
      %s90 = sor.u32 %s88, %s89
      %p91 = scmp.eq.s32.totalorder %s90, 0
      %s93 = sadd.s32 %s92, 1
      %s94 = scalar_select %p91, %s92, %s93
      %p97 = pneg %p91
      %p98 = scmp.eq.s32.totalorder %s14, 3
      %p99 = por %p97, %p98
      %p100 = scmp.ne.s32.totalorder %s92, %s95
      %p101 = scmp.eq.s32.totalorder %s14, 0
      %p102 = por %p100, %p101
      %p103 = scmp.ne.s32.totalorder %s92, %s95
      %p104 = scmp.eq.s32.totalorder %s19, 3
      %p105 = por %p103, %p104
      %p106 = scmp.ne.s32.totalorder %s95, %s96
      %p107 = scmp.eq.s32.totalorder %s19, 0
      %p108 = por %p106, %p107
      %p109 = scmp.ne.s32.totalorder %s95, %s96
      %p110 = scmp.eq.s32.totalorder %s20, 3
      %p111 = por %p109, %p110
      %p113 = scmp.ne.s32.totalorder %s96, %s112
      %p114 = scmp.eq.s32.totalorder %s20, 0
      %p115 = por %p113, %p114
      %p116 = scmp.le.s32.totalorder 1, %s14
      %p117 = scmp.lt.s32.totalorder %s14, 5
      %p118 = pnand %p116, %p117
      %p119 = pneg %p118
      // Predicated region
      $region9: #{tpu_custom_call.1} parent=5 // pred_check
        _
      $region10: #{tpu_custom_call.1} parent=5 // pred_check_branch
        %121 = sbr.rel (%p118) target = $region12
      $region11: #{tpu_custom_call.1} parent=5 // pred_region
        %s122 = ssub.s32 %s14, 1
      $region12: #{tpu_custom_call.1} parent=5 // pred_fallthru
        _
      %p123 = scmp.lt.s32.totalorder %s14, 4
      // Predicated region
      $region13: #{tpu_custom_call.1} parent=5 // pred_check
        %p124 = pneg %p123
      $region14: #{tpu_custom_call.1} parent=5 // pred_check_branch
        %126 = sbr.rel (%p124) target = $region16
      $region15: #{tpu_custom_call.1} parent=5 // pred_region
        // Predicated region
        $region17: #{tpu_custom_call.1} parent=15 // pred_check
          %p127 = pneg %p48
        $region18: #{tpu_custom_call.1} parent=15 // pred_check_branch
          %129 = sbr.rel (%p127) target = $region20
        $region19: #{tpu_custom_call.1} parent=15 // pred_region
          %s130 = sand.u32 %s38, 1
          %s131 = scalar_lea.sflag [#allocation3], %s130
          %s132 = sand.u32 %s38, 1
          %s133 = scalar_lea.vmem [#allocation2], %s132
          %s135 = ssub.s32 16, 16
          %136 = vsyncadd %s131, %s135
          %s137 = smul.addr %s22, 2
          %s138 = sadd.s32 %s21, %s137
          %s139 = smul.addr %s138, 16
          %s140 = scalar_lea.hbm %s0, %s139
          %s142 = sshll.u32 %s133, 4
          %s143 = int_to_ptr.vmem [resolvable:$true] %s142
          %145 = dma.hbm_to_vmem [thread:$0]  %s140, 16, %s143, %s131
        $region20: #{tpu_custom_call.1} parent=15 // pred_fallthru
          _
        // Predicated region
        $region21: #{tpu_custom_call.1} parent=15 // pred_check
          %p146 = pneg %p74
        $region22: #{tpu_custom_call.1} parent=15 // pred_check_branch
          %148 = sbr.rel (%p146) target = $region24
        $region23: #{tpu_custom_call.1} parent=15 // pred_region
          %p149 = scmp.lt.s32.totalorder %s21, 1
          %s150 = scalar_select %p149, %s21, 1
          %s151 = scalar_lea.vmem %s1, %s150
        $region24: #{tpu_custom_call.1} parent=15 // pred_fallthru
          _
      $region16: #{tpu_custom_call.1} parent=5 // pred_fallthru
        _
      %p152 = scmp.le.s32.totalorder 1, %s14
      %p153 = scmp.lt.s32.totalorder %s14, 5
      %p154 = pnand %p152, %p153
      %p155 = pneg %p154
      // Predicated region
      $region25: #{tpu_custom_call.1} parent=5 // pred_check
        _
      $region26: #{tpu_custom_call.1} parent=5 // pred_check_branch
        %157 = sbr.rel (%p154) target = $region28
      $region27: #{tpu_custom_call.1} parent=5 // pred_region
        %s158 = ssub.s32 %s14, 1
        %s159 = sand.u32 %s41, 1
        %s160 = scalar_lea.sflag [#allocation3], %s159
        %s161 = sand.u32 %s41, 1
        %s162 = scalar_lea.vmem [#allocation2], %s161
        // Predicated region
        $region29: #{tpu_custom_call.1} parent=27 // pred_check
          %p163 = pneg %p54
        $region30: #{tpu_custom_call.1} parent=27 // pred_check_branch
          %165 = sbr.rel (%p163) target = $region32
        $region31: #{tpu_custom_call.1} parent=27 // pred_region
          %166 = dma.done %s160, 16
        $region32: #{tpu_custom_call.1} parent=27 // pred_fallthru
          _
        %s167 = sand.u32 %s41, 1
        %s168 = scalar_lea.sflag [#allocation3], %s167
        %s169 = sand.u32 %s41, 1
        %s170 = scalar_lea.vmem [#allocation2], %s169
        %p171 = pneg %p54
        %p172 = pneg %p51
        %p173 = scmp.lt.s32.totalorder %s23, 1
        %s174 = scalar_select %p173, %s23, 1
        %s175 = scalar_lea.vmem %s1, %s174
        %p176 = pneg %p80
        %p177 = pneg %p77
        %p178 = pneg %p108
        %p179 = pneg %p105
        %s180 = sand.u32 %s95, 1
        %s181 = scalar_lea.sflag [#allocation4], %s180
        %s182 = sand.u32 %s95, 1
        %s183 = scalar_lea.vmem [#allocation5], %s182
        %p184 = scmp.lt.s32.totalorder %s23, 1
        %s185 = scalar_select %p184, %s23, 1
        %s186 = scalar_lea.vmem %s1, %s185
        %v187 = vld [vmem:[%s162] sm:$0x1]
        %v188 = vld [vmem:[%s186] sm:$0x1]
        %v189 = vadd.f32 %v187, %v188
        %190 = vst [vmem:[%s183] sm:$0x1] %v189
        %s191 = sand.u32 %s95, 1
        %s192 = scalar_lea.sflag [#allocation4], %s191
        %s193 = sand.u32 %s95, 1
        %s194 = scalar_lea.vmem [#allocation5], %s193
        // Predicated region
        $region33: #{tpu_custom_call.1} parent=27 // pred_check
          %p195 = pneg %p105
        $region34: #{tpu_custom_call.1} parent=27 // pred_check_branch
          %197 = sbr.rel (%p195) target = $region36
        $region35: #{tpu_custom_call.1} parent=27 // pred_region
          %s199 = ssub.s32 16, 16
          %200 = vsyncadd %s192, %s199
          %s201 = smul.addr %s24, 2
          %s202 = sadd.s32 %s23, %s201
          %s203 = smul.addr %s202, 16
          %s204 = scalar_lea.hbm %s2, %s203
          %s206 = sshll.u32 %s194, 4
          %s207 = int_to_ptr.vmem [resolvable:$true] %s206
          %209 = dma.vmem_to_hbm [thread:$0]  %s207, 16, %s204, %s192
        $region36: #{tpu_custom_call.1} parent=27 // pred_fallthru
          _
      $region28: #{tpu_custom_call.1} parent=5 // pred_fallthru
        _
      %p210 = scmp.le.s32.totalorder 2, %s14
      // Predicated region
      $region37: #{tpu_custom_call.1} parent=5 // pred_check
        %p211 = pneg %p210
      $region38: #{tpu_custom_call.1} parent=5 // pred_check_branch
        %213 = sbr.rel (%p211) target = $region40
      $region39: #{tpu_custom_call.1} parent=5 // pred_region
        %s214 = ssub.s32 %s14, 2
        // Predicated region
        $region41: #{tpu_custom_call.1} parent=39 // pred_check
          %p215 = pneg %p111
        $region42: #{tpu_custom_call.1} parent=39 // pred_check_branch
          %217 = sbr.rel (%p215) target = $region44
        $region43: #{tpu_custom_call.1} parent=39 // pred_region
          %s218 = sand.u32 %s96, 1
          %s219 = scalar_lea.sflag [#allocation4], %s218
          %s220 = sand.u32 %s96, 1
          %s221 = scalar_lea.vmem [#allocation5], %s220
          %222 = dma.done %s219, 16
        $region44: #{tpu_custom_call.1} parent=39 // pred_fallthru
          _
      $region40: #{tpu_custom_call.1} parent=5 // pred_fallthru
        _
    $region6: #{tpu_custom_call.1} parent=1 // loop_footer
      %s18 = sadd.s32 1, %s14
    $region7: #{tpu_custom_call.1} parent=1 // loop_footer_branch
      %13 = sbr.rel target = $region3
    $region8: #{tpu_custom_call.1} parent=1 // loop_exit
      _
    %223 = vsyncpa [#allocation3], 1
    %s224 = scalar_lea.sflag [#allocation3], 1
    %225 = vsyncpa %s224, 1
    %226 = vsyncpa [#allocation4], 1
    %s227 = scalar_lea.sflag [#allocation4], 1
    %228 = vsyncpa %s227, 1

</llo_original>
